<compile_context>
chip_gen: v7x
topology: tpu7x:2x2x1
jax: 0.10.0
libtpu: 0.0.40
codegen_flags: <defaults>
</compile_context>

<pallas_src>
import functools

import jax
import jax.numpy as jnp
from jax.experimental import pallas as pl
from jax.experimental.pallas import tpu as pltpu


def _round_up(x, m):
    return (x + m - 1) // m * m


def _elu(x):
    # alpha = 1.0 (nn.ELU default). Clamp the exp argument so the unselected
    # positive branch never evaluates exp(large); the absolute error vs expm1
    # near 0- is far below the bf16 matmul noise floor.
    return jnp.where(x > 0, x, jnp.exp(jnp.minimum(x, 0.0)) - 1.0)


def intrinsic_critic_kernel(feat_ref, act_ref, w_ref, wv_ref, b_ref, out_ref, *,
                            feat_dim):
    """Per grid step:
      feat_ref: (Bblk, F)   f32  -- feature_extract output, unpadded lanes
      act_ref : (Bblk, 1)   i32
      w_ref   : (7, FP, FP) bf16 -- packed (in,out)-layout weights, grid-resident
      wv_ref  : (8, FP)     bf16 -- value-head weights in row 0, rows 1..7 zero
      b_ref   : (8, FP)     f32  -- biases; row 7 col 0 = value bias
      out_ref : (8, Bblk)   f32  -- row 0 = value(x), rows 1..7 junk (lane-major)

    Packed layer order in w_ref: 0..2 predict[0..2], 3 fc1 feature-half (carries
    the fc1 bias), 4 fc1 predict-half, 5 fc2, 6 fc3.
    """
    bblk = feat_ref.shape[0]
    fp = w_ref.shape[-1]
    f32 = jnp.float32
    bf16 = jnp.bfloat16

    def bias(i):
        return b_ref[i:i + 1, :]                    # (1, FP) f32, static slice

    def dense(x, i):
        # bf16 operands -> single native MXU pass; accumulate + bias in f32.
        return jnp.dot(x.astype(bf16), w_ref[i], preferred_element_type=f32) + bias(i)

    # one_hot(action, A): padded lanes compare unequal -> zeros, already FP wide.
    lane = jax.lax.broadcasted_iota(jnp.int32, (bblk, fp), 1)
    x = (lane == act_ref[...]).astype(f32)

    x = _elu(dense(x, 0))                           # predict[0] + ELU (lossless dot)
    x = _elu(dense(x, 1))                           # predict[1] + ELU
    x = _elu(dense(x, 2))                           # predict[2] + ELU

    # fc1(cat([feature, x], -1)) == feature @ W_f + x @ W_p + b  (no concat).
    # feature stays F lanes wide; contract against the first F rows of w[3].
    y = (jnp.dot(feat_ref[...].astype(bf16), w_ref[3, :feat_dim, :],
                 preferred_element_type=f32)
         + jnp.dot(x.astype(bf16), w_ref[4], preferred_element_type=f32)
         + bias(3))
    x = _elu(y)                                     # fc1 + ELU
    x = _elu(dense(x, 5))                           # fc2 + ELU
    x = _elu(dense(x, 6))                           # fc3 + ELU

    # Value head, emitted lane-major: (8,FP)@(FP,Bblk) puts the batch on lanes so
    # the writeback is one 8-sublane tile per block instead of a (Bblk, FP) slab.
    # The (Bblk, FP) transpose runs on the otherwise-idle XLU slot.
    xt = x.T.astype(bf16)                           # (FP, Bblk)
    val = jnp.dot(wv_ref[...], xt, preferred_element_type=f32) + b_ref[7:8, 0:1]
    out_ref[...] = val


def pack_intrinsic_critic_params(params, action_size, feature_size):
    """Init-time packing (runs once, not in the per-call forward path):
       - layer weights -> bf16, (in,out) layout, zero-padded to (FP,FP), stacked (7,FP,FP)
       - value-head weights -> (8, FP) bf16 with the real row in row 0
       - biases -> (8, FP) f32 (row 7 col 0 = value bias)."""
    f, a = feature_size, action_size
    fp = _round_up(max(f, a, 1), 128)

    def pad_w(w_t):
        wp = jnp.zeros((fp, fp), jnp.float32)
        wp = wp.at[:w_t.shape[0], :w_t.shape[1]].set(w_t.astype(jnp.float32))
        return wp.astype(jnp.bfloat16)

    def pad_b(b):
        return jnp.zeros((fp,), jnp.float32).at[:b.shape[0]].set(b.astype(jnp.float32))

    fc1_w = params["fc1_w"]                          # (F, 2F), torch (out, in)
    w_entries = [
        params["p1_w"].T,                            # Linear(A, F)
        params["p2_w"].T,                            # Linear(F, F)
        params["p3_w"].T,                            # Linear(F, F)
        fc1_w[:, :f].T,                              # fc1, feature half (+bias row 3)
        fc1_w[:, f:].T,                              # fc1, predict half
        params["fc2_w"].T,                           # Linear(F, F)
        params["fc3_w"].T,                           # Linear(F, F)
    ]
    b_entries = [
        params["p1_b"], params["p2_b"], params["p3_b"],
        params["fc1_b"], jnp.zeros((f,), jnp.float32),
        params["fc2_b"], params["fc3_b"],
        params["value_b"],                           # row 7: value bias at col 0
    ]
    wpack = jnp.stack([pad_w(w) for w in w_entries])            # (7, FP, FP) bf16
    wval = (jnp.zeros((8, fp), jnp.float32)
            .at[0, :f].set(params["value_w"][0].astype(jnp.float32))
            .astype(jnp.bfloat16))                              # (8, FP) bf16
    bpack = jnp.stack([pad_b(b) for b in b_entries])            # (8, FP) f32
    return wpack, wval, bpack


def _pick_bblk(b, block_b):
    if b >= 2 * block_b:
        return block_b
    if b >= 256:
        # >=2 grid steps so the "parallel" batch axis can shard across v7x's two
        # TensorCores; keep blocks a multiple of 128 rows for clean tiling.
        return min(block_b, _round_up((b + 1) // 2, 128))
    return _round_up(b, 8)


def intrinsic_critic_forward(feature, action, wpack, wval, bpack, *, block_b=512):
    """feature: (B, F) output of feature_extract; action: (B,) int. Returns (B, 1)."""
    b, f = feature.shape
    fp = wpack.shape[-1]
    n_w = wpack.shape[0]

    bblk = _pick_bblk(b, block_b)
    bp = _round_up(b, bblk)
    nblk = bp // bblk

    feat = feature.astype(jnp.float32)
    act = action.astype(jnp.int32).reshape(b, 1)
    if bp != b:                                      # row padding only (no lane pad)
        feat = jnp.pad(feat, ((0, bp - b), (0, 0)))
        act = jnp.pad(act, ((0, bp - b), (0, 0)))

    kernel = functools.partial(intrinsic_critic_kernel, feat_dim=f)

    cost = pl.CostEstimate(
        flops=2 * bp * fp * (6 * fp + f + 8),
        transcendentals=6 * bp * fp,
        bytes_accessed=(bp * f * 4 + bp * 4 + wpack.size * 2 + wval.size * 2
                        + bpack.size * 4 + 8 * bp * 4),
    )

    out = pl.pallas_call(
        kernel,
        grid=(nblk,),
        in_specs=[
            pl.BlockSpec((bblk, f), lambda i: (i, 0)),          # feature (unpadded lanes)
            pl.BlockSpec((bblk, 1), lambda i: (i, 0)),          # action
            pl.BlockSpec((n_w, fp, fp), lambda i: (0, 0, 0)),   # packed weights (resident)
            pl.BlockSpec((8, fp), lambda i: (0, 0)),            # value-head weights
            pl.BlockSpec((8, fp), lambda i: (0, 0)),            # packed biases
        ],
        out_specs=pl.BlockSpec((8, bblk), lambda i: (0, i)),    # lane-major value row
        out_shape=jax.ShapeDtypeStruct((8, bp), jnp.float32),
        compiler_params=pltpu.CompilerParams(dimension_semantics=("parallel",)),
        cost_estimate=cost,
    )(feat, act, wpack, wval, bpack)
    # Row 0 holds the value for each batch row; rows 1..7 are padding of the tile.
    return out[0, :b].reshape(b, 1)


# ----------------------------- reference & demo -----------------------------

def _reference_forward(feature, action, params, action_size):
    hp = jax.lax.Precision.HIGHEST

    def lin(x, w, b):
        return jnp.dot(x, w.T, precision=hp) + b

    x = jax.nn.one_hot(action, action_size, dtype=jnp.float32)
    x = _elu(lin(x, params["p1_w"], params["p1_b"]))
    x = _elu(lin(x, params["p2_w"], params["p2_b"]))
    x = _elu(lin(x, params["p3_w"], params["p3_b"]))
    x = jnp.concatenate([feature, x], axis=-1)
    x = _elu(lin(x, params["fc1_w"], params["fc1_b"]))
    x = _elu(lin(x, params["fc2_w"], params["fc2_b"]))
    x = _elu(lin(x, params["fc3_w"], params["fc3_b"]))
    return lin(x, params["value_w"], params["value_b"])


def _torch_linear_init(key, out_features, in_features):
    kw, kb = jax.random.split(key)
    bound = 1.0 / jnp.sqrt(jnp.float32(in_features))
    w = jax.random.uniform(kw, (out_features, in_features), jnp.float32, -bound, bound)
    b = jax.random.uniform(kb, (out_features,), jnp.float32, -bound, bound)
    return w, b


if __name__ == "__main__":
    action_size = 4
    feature_size = 32
    batch = 8

    key = jax.random.PRNGKey(0)
    (k_feat, k_act, k_p1, k_p2, k_p3, k_fc1, k_fc2, k_fc3, k_val) = jax.random.split(key, 9)

    # TODO(synk): feature_extract is an external submodule with unspecified
    # architecture; the kernel consumes its output `feature` directly.
    feature = jax.random.normal(k_feat, (batch, feature_size), jnp.float32)
    action = jax.random.randint(k_act, (batch,), 0, action_size)

    p1_w, p1_b = _torch_linear_init(k_p1, feature_size, action_size)
    p2_w, p2_b = _torch_linear_init(k_p2, feature_size, feature_size)
    p3_w, p3_b = _torch_linear_init(k_p3, feature_size, feature_size)
    fc1_w, fc1_b = _torch_linear_init(k_fc1, feature_size, 2 * feature_size)
    fc2_w, fc2_b = _torch_linear_init(k_fc2, feature_size, feature_size)
    fc3_w, fc3_b = _torch_linear_init(k_fc3, feature_size, feature_size)
    val_w, val_b = _torch_linear_init(k_val, 1, feature_size)

    params = dict(p1_w=p1_w, p1_b=p1_b, p2_w=p2_w, p2_b=p2_b, p3_w=p3_w, p3_b=p3_b,
                  fc1_w=fc1_w, fc1_b=fc1_b, fc2_w=fc2_w, fc2_b=fc2_b,
                  fc3_w=fc3_w, fc3_b=fc3_b, value_w=val_w, value_b=val_b)

    # One-time packing (init time, not in the per-call forward path).
    wpack, wval, bpack = pack_intrinsic_critic_params(params, action_size, feature_size)

    run = jax.jit(intrinsic_critic_forward)
    out = run(feature, action, wpack, wval, bpack)
    jax.block_until_ready(out)

    ref = _reference_forward(feature, action, params, action_size)
    assert out.shape == (batch, 1)
    assert bool(jnp.all(jnp.isfinite(out)))
    # bf16 weights/activations in the kernel vs. an f32 HIGHEST-precision
    # reference: agreement is at the few-1e-3 level; 2e-2 gives ample margin.
    assert bool(jnp.allclose(out, ref, atol=2e-2, rtol=2e-2))

    print("KERNEL_OK")
</pallas_src>

<mosaic_0001>
module attributes {stable_mosaic.version = 11 : i64} {
  func.func @intrinsic_critic_kernel(%arg0: i32, %arg1: memref<8x32xf32, #tpu.memory_space<vmem>>, %arg2: memref<8x1xi32, #tpu.memory_space<vmem>>, %arg3: memref<7x128x128xbf16, #tpu.memory_space<vmem>>, %arg4: memref<8x128xbf16, #tpu.memory_space<vmem>>, %arg5: memref<8x128xf32, #tpu.memory_space<vmem>>, %arg6: memref<8x8xf32, #tpu.memory_space<vmem>>) attributes {dimension_semantics = [#tpu.dimension_semantics<parallel>], iteration_bounds = array<i64: 1>, scalar_prefetch = 0 : i64, scratch_operands = 0 : i64, tpu.core_type = #tpu.core_type<tc>, window_params = [{transform_indices = @transform_0, window_bounds = array<i64: 8, 32>}, {transform_indices = @transform_1, window_bounds = array<i64: 8, 1>}, {pipeline_mode = #tpu.pipeline_mode<synchronous>, transform_indices = @transform_2, window_bounds = array<i64: 7, 128, 128>}, {pipeline_mode = #tpu.pipeline_mode<synchronous>, transform_indices = @transform_3, window_bounds = array<i64: 8, 128>}, {pipeline_mode = #tpu.pipeline_mode<synchronous>, transform_indices = @transform_4, window_bounds = array<i64: 8, 128>}, {transform_indices = @transform_5, window_bounds = array<i64: 8, 8>}]} {
    %0 = tpu.iota {dimensions = array<i32: 1>} : vector<8x128xi32>
    %c0 = arith.constant 0 : index
    %c0_0 = arith.constant 0 : index
    %1 = vector.load %arg2[%c0, %c0_0] : memref<8x1xi32, #tpu.memory_space<vmem>>, vector<8x1xi32>
    %2 = vector.broadcast %1 : vector<8x1xi32> to vector<8x128xi32>
    %3 = arith.cmpi eq, %0, %2 : vector<8x128xi32>
    %4 = arith.extui %3 : vector<8x128xi1> to vector<8x128xi32>
    %5 = arith.sitofp %4 : vector<8x128xi32> to vector<8x128xf32>
    %6 = arith.truncf %5 : vector<8x128xf32> to vector<8x128xbf16>
    %c0_1 = arith.constant 0 : index
    %c0_2 = arith.constant 0 : index
    %c0_3 = arith.constant 0 : index
    %7 = vector.load %arg3[%c0_1, %c0_2, %c0_3] : memref<7x128x128xbf16, #tpu.memory_space<vmem>>, vector<1x128x128xbf16>
    %8 = vector.shape_cast %7 : vector<1x128x128xbf16> to vector<128x128xbf16>
    %cst = arith.constant dense<0.000000e+00> : vector<8x128xf32>
    %9 = tpu.matmul %6, %8, %cst {dimension_numbers = #tpu.dot_dimension_numbers<[1], [0], [0], [1], [0, 0, 1, 1], [], []>} : vector<8x128xbf16>, vector<128x128xbf16>, vector<8x128xf32> -> vector<8x128xf32>
    %c0_4 = arith.constant 0 : index
    %c0_5 = arith.constant 0 : index
    %10 = vector.load %arg5[%c0_4, %c0_5] : memref<8x128xf32, #tpu.memory_space<vmem>>, vector<1x128xf32>
    %11 = vector.broadcast %10 : vector<1x128xf32> to vector<8x128xf32>
    %12 = arith.addf %9, %11 : vector<8x128xf32>
    %cst_6 = arith.constant 0.000000e+00 : f32
    %13 = vector.broadcast %cst_6 : f32 to vector<8x128xf32>
    %14 = arith.cmpf ogt, %12, %13 : vector<8x128xf32>
    %cst_7 = arith.constant 0.000000e+00 : f32
    %15 = vector.broadcast %cst_7 : f32 to vector<8x128xf32>
    %16 = arith.minimumf %12, %15 : vector<8x128xf32>
    %17 = math.exp %16 : vector<8x128xf32>
    %cst_8 = arith.constant 1.000000e+00 : f32
    %18 = vector.broadcast %cst_8 : f32 to vector<8x128xf32>
    %19 = arith.subf %17, %18 : vector<8x128xf32>
    %20 = arith.select %14, %12, %19 : vector<8x128xi1>, vector<8x128xf32>
    %21 = arith.truncf %20 : vector<8x128xf32> to vector<8x128xbf16>
    %c1 = arith.constant 1 : index
    %c0_9 = arith.constant 0 : index
    %c0_10 = arith.constant 0 : index
    %22 = vector.load %arg3[%c1, %c0_9, %c0_10] : memref<7x128x128xbf16, #tpu.memory_space<vmem>>, vector<1x128x128xbf16>
    %23 = vector.shape_cast %22 : vector<1x128x128xbf16> to vector<128x128xbf16>
    %cst_11 = arith.constant dense<0.000000e+00> : vector<8x128xf32>
    %24 = tpu.matmul %21, %23, %cst_11 {dimension_numbers = #tpu.dot_dimension_numbers<[1], [0], [0], [1], [0, 0, 1, 1], [], []>} : vector<8x128xbf16>, vector<128x128xbf16>, vector<8x128xf32> -> vector<8x128xf32>
    %c1_12 = arith.constant 1 : index
    %c0_13 = arith.constant 0 : index
    %25 = vector.load %arg5[%c1_12, %c0_13] : memref<8x128xf32, #tpu.memory_space<vmem>>, vector<1x128xf32>
    %26 = vector.broadcast %25 : vector<1x128xf32> to vector<8x128xf32>
    %27 = arith.addf %24, %26 : vector<8x128xf32>
    %cst_14 = arith.constant 0.000000e+00 : f32
    %28 = vector.broadcast %cst_14 : f32 to vector<8x128xf32>
    %29 = arith.cmpf ogt, %27, %28 : vector<8x128xf32>
    %cst_15 = arith.constant 0.000000e+00 : f32
    %30 = vector.broadcast %cst_15 : f32 to vector<8x128xf32>
    %31 = arith.minimumf %27, %30 : vector<8x128xf32>
    %32 = math.exp %31 : vector<8x128xf32>
    %cst_16 = arith.constant 1.000000e+00 : f32
    %33 = vector.broadcast %cst_16 : f32 to vector<8x128xf32>
    %34 = arith.subf %32, %33 : vector<8x128xf32>
    %35 = arith.select %29, %27, %34 : vector<8x128xi1>, vector<8x128xf32>
    %36 = arith.truncf %35 : vector<8x128xf32> to vector<8x128xbf16>
    %c2 = arith.constant 2 : index
    %c0_17 = arith.constant 0 : index
    %c0_18 = arith.constant 0 : index
    %37 = vector.load %arg3[%c2, %c0_17, %c0_18] : memref<7x128x128xbf16, #tpu.memory_space<vmem>>, vector<1x128x128xbf16>
    %38 = vector.shape_cast %37 : vector<1x128x128xbf16> to vector<128x128xbf16>
    %cst_19 = arith.constant dense<0.000000e+00> : vector<8x128xf32>
    %39 = tpu.matmul %36, %38, %cst_19 {dimension_numbers = #tpu.dot_dimension_numbers<[1], [0], [0], [1], [0, 0, 1, 1], [], []>} : vector<8x128xbf16>, vector<128x128xbf16>, vector<8x128xf32> -> vector<8x128xf32>
    %c2_20 = arith.constant 2 : index
    %c0_21 = arith.constant 0 : index
    %40 = vector.load %arg5[%c2_20, %c0_21] : memref<8x128xf32, #tpu.memory_space<vmem>>, vector<1x128xf32>
    %41 = vector.broadcast %40 : vector<1x128xf32> to vector<8x128xf32>
    %42 = arith.addf %39, %41 : vector<8x128xf32>
    %cst_22 = arith.constant 0.000000e+00 : f32
    %43 = vector.broadcast %cst_22 : f32 to vector<8x128xf32>
    %44 = arith.cmpf ogt, %42, %43 : vector<8x128xf32>
    %cst_23 = arith.constant 0.000000e+00 : f32
    %45 = vector.broadcast %cst_23 : f32 to vector<8x128xf32>
    %46 = arith.minimumf %42, %45 : vector<8x128xf32>
    %47 = math.exp %46 : vector<8x128xf32>
    %cst_24 = arith.constant 1.000000e+00 : f32
    %48 = vector.broadcast %cst_24 : f32 to vector<8x128xf32>
    %49 = arith.subf %47, %48 : vector<8x128xf32>
    %50 = arith.select %44, %42, %49 : vector<8x128xi1>, vector<8x128xf32>
    %c0_25 = arith.constant 0 : index
    %c0_26 = arith.constant 0 : index
    %51 = vector.load %arg1[%c0_25, %c0_26] : memref<8x32xf32, #tpu.memory_space<vmem>>, vector<8x32xf32>
    %52 = arith.truncf %51 : vector<8x32xf32> to vector<8x32xbf16>
    %c3 = arith.constant 3 : index
    %c0_27 = arith.constant 0 : index
    %c0_28 = arith.constant 0 : index
    %53 = vector.load %arg3[%c3, %c0_27, %c0_28] : memref<7x128x128xbf16, #tpu.memory_space<vmem>>, vector<1x32x128xbf16>
    %54 = vector.shape_cast %53 : vector<1x32x128xbf16> to vector<32x128xbf16>
    %cst_29 = arith.constant dense<0.000000e+00> : vector<8x128xf32>
    %55 = tpu.matmul %52, %54, %cst_29 {dimension_numbers = #tpu.dot_dimension_numbers<[1], [0], [0], [1], [0, 0, 1, 1], [], []>} : vector<8x32xbf16>, vector<32x128xbf16>, vector<8x128xf32> -> vector<8x128xf32>
    %56 = arith.truncf %50 : vector<8x128xf32> to vector<8x128xbf16>
    %c4 = arith.constant 4 : index
    %c0_30 = arith.constant 0 : index
    %c0_31 = arith.constant 0 : index
    %57 = vector.load %arg3[%c4, %c0_30, %c0_31] : memref<7x128x128xbf16, #tpu.memory_space<vmem>>, vector<1x128x128xbf16>
    %58 = vector.shape_cast %57 : vector<1x128x128xbf16> to vector<128x128xbf16>
    %cst_32 = arith.constant dense<0.000000e+00> : vector<8x128xf32>
    %59 = tpu.matmul %56, %58, %cst_32 {dimension_numbers = #tpu.dot_dimension_numbers<[1], [0], [0], [1], [0, 0, 1, 1], [], []>} : vector<8x128xbf16>, vector<128x128xbf16>, vector<8x128xf32> -> vector<8x128xf32>
    %60 = arith.addf %55, %59 : vector<8x128xf32>
    %c3_33 = arith.constant 3 : index
    %c0_34 = arith.constant 0 : index
    %61 = vector.load %arg5[%c3_33, %c0_34] : memref<8x128xf32, #tpu.memory_space<vmem>>, vector<1x128xf32>
    %62 = vector.broadcast %61 : vector<1x128xf32> to vector<8x128xf32>
    %63 = arith.addf %60, %62 : vector<8x128xf32>
    %cst_35 = arith.constant 0.000000e+00 : f32
    %64 = vector.broadcast %cst_35 : f32 to vector<8x128xf32>
    %65 = arith.cmpf ogt, %63, %64 : vector<8x128xf32>
    %cst_36 = arith.constant 0.000000e+00 : f32
    %66 = vector.broadcast %cst_36 : f32 to vector<8x128xf32>
    %67 = arith.minimumf %63, %66 : vector<8x128xf32>
    %68 = math.exp %67 : vector<8x128xf32>
    %cst_37 = arith.constant 1.000000e+00 : f32
    %69 = vector.broadcast %cst_37 : f32 to vector<8x128xf32>
    %70 = arith.subf %68, %69 : vector<8x128xf32>
    %71 = arith.select %65, %63, %70 : vector<8x128xi1>, vector<8x128xf32>
    %72 = arith.truncf %71 : vector<8x128xf32> to vector<8x128xbf16>
    %c5 = arith.constant 5 : index
    %c0_38 = arith.constant 0 : index
    %c0_39 = arith.constant 0 : index
    %73 = vector.load %arg3[%c5, %c0_38, %c0_39] : memref<7x128x128xbf16, #tpu.memory_space<vmem>>, vector<1x128x128xbf16>
    %74 = vector.shape_cast %73 : vector<1x128x128xbf16> to vector<128x128xbf16>
    %cst_40 = arith.constant dense<0.000000e+00> : vector<8x128xf32>
    %75 = tpu.matmul %72, %74, %cst_40 {dimension_numbers = #tpu.dot_dimension_numbers<[1], [0], [0], [1], [0, 0, 1, 1], [], []>} : vector<8x128xbf16>, vector<128x128xbf16>, vector<8x128xf32> -> vector<8x128xf32>
    %c5_41 = arith.constant 5 : index
    %c0_42 = arith.constant 0 : index
    %76 = vector.load %arg5[%c5_41, %c0_42] : memref<8x128xf32, #tpu.memory_space<vmem>>, vector<1x128xf32>
    %77 = vector.broadcast %76 : vector<1x128xf32> to vector<8x128xf32>
    %78 = arith.addf %75, %77 : vector<8x128xf32>
    %cst_43 = arith.constant 0.000000e+00 : f32
    %79 = vector.broadcast %cst_43 : f32 to vector<8x128xf32>
    %80 = arith.cmpf ogt, %78, %79 : vector<8x128xf32>
    %cst_44 = arith.constant 0.000000e+00 : f32
    %81 = vector.broadcast %cst_44 : f32 to vector<8x128xf32>
    %82 = arith.minimumf %78, %81 : vector<8x128xf32>
    %83 = math.exp %82 : vector<8x128xf32>
    %cst_45 = arith.constant 1.000000e+00 : f32
    %84 = vector.broadcast %cst_45 : f32 to vector<8x128xf32>
    %85 = arith.subf %83, %84 : vector<8x128xf32>
    %86 = arith.select %80, %78, %85 : vector<8x128xi1>, vector<8x128xf32>
    %87 = arith.truncf %86 : vector<8x128xf32> to vector<8x128xbf16>
    %c6 = arith.constant 6 : index
    %c0_46 = arith.constant 0 : index
    %c0_47 = arith.constant 0 : index
    %88 = vector.load %arg3[%c6, %c0_46, %c0_47] : memref<7x128x128xbf16, #tpu.memory_space<vmem>>, vector<1x128x128xbf16>
    %89 = vector.shape_cast %88 : vector<1x128x128xbf16> to vector<128x128xbf16>
    %cst_48 = arith.constant dense<0.000000e+00> : vector<8x128xf32>
    %90 = tpu.matmul %87, %89, %cst_48 {dimension_numbers = #tpu.dot_dimension_numbers<[1], [0], [0], [1], [0, 0, 1, 1], [], []>} : vector<8x128xbf16>, vector<128x128xbf16>, vector<8x128xf32> -> vector<8x128xf32>
    %c6_49 = arith.constant 6 : index
    %c0_50 = arith.constant 0 : index
    %91 = vector.load %arg5[%c6_49, %c0_50] : memref<8x128xf32, #tpu.memory_space<vmem>>, vector<1x128xf32>
    %92 = vector.broadcast %91 : vector<1x128xf32> to vector<8x128xf32>
    %93 = arith.addf %90, %92 : vector<8x128xf32>
    %cst_51 = arith.constant 0.000000e+00 : f32
    %94 = vector.broadcast %cst_51 : f32 to vector<8x128xf32>
    %95 = arith.cmpf ogt, %93, %94 : vector<8x128xf32>
    %cst_52 = arith.constant 0.000000e+00 : f32
    %96 = vector.broadcast %cst_52 : f32 to vector<8x128xf32>
    %97 = arith.minimumf %93, %96 : vector<8x128xf32>
    %98 = math.exp %97 : vector<8x128xf32>
    %cst_53 = arith.constant 1.000000e+00 : f32
    %99 = vector.broadcast %cst_53 : f32 to vector<8x128xf32>
    %100 = arith.subf %98, %99 : vector<8x128xf32>
    %101 = arith.select %95, %93, %100 : vector<8x128xi1>, vector<8x128xf32>
    %102 = tpu.transpose %101, [1, 0] : vector<8x128xf32> -> vector<128x8xf32>
    %103 = arith.truncf %102 : vector<128x8xf32> to vector<128x8xbf16>
    %c0_54 = arith.constant 0 : index
    %c0_55 = arith.constant 0 : index
    %104 = vector.load %arg4[%c0_54, %c0_55] : memref<8x128xbf16, #tpu.memory_space<vmem>>, vector<8x128xbf16>
    %cst_56 = arith.constant dense<0.000000e+00> : vector<8x8xf32>
    %105 = tpu.matmul %104, %103, %cst_56 {dimension_numbers = #tpu.dot_dimension_numbers<[1], [0], [0], [1], [0, 0, 1, 1], [], []>} : vector<8x128xbf16>, vector<128x8xbf16>, vector<8x8xf32> -> vector<8x8xf32>
    %c7 = arith.constant 7 : index
    %c0_57 = arith.constant 0 : index
    %106 = vector.load %arg5[%c7, %c0_57] : memref<8x128xf32, #tpu.memory_space<vmem>>, vector<1x1xf32>
    %107 = vector.broadcast %106 : vector<1x1xf32> to vector<8x8xf32>
    %108 = arith.addf %105, %107 : vector<8x8xf32>
    %c0_58 = arith.constant 0 : index
    %c0_59 = arith.constant 0 : index
    %109 = vector.load %arg6[%c0_58, %c0_59] : memref<8x8xf32, #tpu.memory_space<vmem>>, vector<8x8xf32>
    tpu.vector_store %arg6[%c0_58, %c0_59], %108 {strides = array<i32>} : memref<8x8xf32, #tpu.memory_space<vmem>>, vector<8x8xf32>,
    return
  }
  func.func @transform_0(%arg0: i32) -> (i32, i32) {
    %c0_i32 = arith.constant 0 : i32
    %c0_i32_0 = arith.constant 0 : i32
    return %arg0, %c0_i32 : i32, i32
  }
  func.func @transform_1(%arg0: i32) -> (i32, i32) {
    %c0_i32 = arith.constant 0 : i32
    %c0_i32_0 = arith.constant 0 : i32
    return %arg0, %c0_i32 : i32, i32
  }
  func.func @transform_2(%arg0: i32) -> (i32, i32, i32) {
    %c0_i32 = arith.constant 0 : i32
    %c0_i32_0 = arith.constant 0 : i32
    %c0_i32_1 = arith.constant 0 : i32
    %c0_i32_2 = arith.constant 0 : i32
    return %c0_i32, %c0_i32_0, %c0_i32_1 : i32, i32, i32
  }
  func.func @transform_3(%arg0: i32) -> (i32, i32) {
    %c0_i32 = arith.constant 0 : i32
    %c0_i32_0 = arith.constant 0 : i32
    %c0_i32_1 = arith.constant 0 : i32
    return %c0_i32, %c0_i32_0 : i32, i32
  }
  func.func @transform_4(%arg0: i32) -> (i32, i32) {
    %c0_i32 = arith.constant 0 : i32
    %c0_i32_0 = arith.constant 0 : i32
    %c0_i32_1 = arith.constant 0 : i32
    return %c0_i32, %c0_i32_0 : i32, i32
  }
  func.func @transform_5(%arg0: i32) -> (i32, i32) {
    %c0_i32 = arith.constant 0 : i32
    %c0_i32_0 = arith.constant 0 : i32
    return %c0_i32, %arg0 : i32, i32
  }
}

</mosaic_0001>

<llo_original>
// kernel: intrinsic_critic_forward.1
$region0: #{intrinsic_critic_forward.1}
  #allocation0 [shape = 'u32[]', space=smem, size = 0x4, offset = 0x4, fixed_abs, tag = 'smem constant byte address 0x4 - core index']
  #allocation1 [shape = 'u32[144,128]{1,0:T(1,128)}', space=vmem, size = 0x12000, scoped, tag = 'internal scratch']
  %s0 = inlined_call_operand.vmem [shape: f32[8,32], index: 0, kind: input, shape index: {}]
  %s1 = inlined_call_operand.vmem [shape: s32[8,1], index: 1, kind: input, shape index: {}]
  %s2 = inlined_call_operand.hbm [shape: bf16[7,128,128], index: 2, kind: input, shape index: {}]
  %s3 = inlined_call_operand.vmem [shape: bf16[8,128], index: 3, kind: input, shape index: {}]
  %s4 = inlined_call_operand.vmem [shape: f32[8,128], index: 4, kind: input, shape index: {}]
  %s5 = inlined_call_operand.vmem [shape: f32[8,8], index: 5, kind: output, shape index: {}]
  %s6 = sld [smem:[#allocation0]]
  $region34: #{intrinsic_critic_forward.1} parent=0
    _
  %s8 = ssub.s32 1, %s6
  %s9 = scalar_select 0, %s8, %s6
  $region1: #{intrinsic_critic_forward.1} parent=0
    #allocation2 [shape = 'u8[229376]{0}', space=vmem, size = 0x38000, scoped, tag = 'input window, operand 2, single buffered']
    #allocation3 [shape = 's32[1]{0}', space=sflag, size = 0x4, scoped, tag = 'scoped memory for intrinsic_critic_forward.1']
    %10 = vsyncpa [#allocation3], 0
    // Predicated region
    $region2: #{intrinsic_critic_forward.1} parent=1 // pred_check
      _
    $region3: #{intrinsic_critic_forward.1} parent=1 // pred_check_branch
      %12 = sbr.rel (0) target = $region5
    $region4: #{intrinsic_critic_forward.1} parent=1 // pred_region
      _
    $region5: #{intrinsic_critic_forward.1} parent=1 // pred_fallthru
      _
    // Predicated region
    $region6: #{intrinsic_critic_forward.1} parent=1 // pred_check
      _
    $region7: #{intrinsic_critic_forward.1} parent=1 // pred_check_branch
      %14 = sbr.rel (0) target = $region9
    $region8: #{intrinsic_critic_forward.1} parent=1 // pred_region
      _
    $region9: #{intrinsic_critic_forward.1} parent=1 // pred_fallthru
      _
    // Predicated region
    $region10: #{intrinsic_critic_forward.1} parent=1 // pred_check
      _
    $region11: #{intrinsic_critic_forward.1} parent=1 // pred_check_branch
      %16 = sbr.rel (0) target = $region13
    $region12: #{intrinsic_critic_forward.1} parent=1 // pred_region
      %s18 = ssub.s32 7168, 7168
      %19 = vsyncadd [#allocation3], %s18
      %s20 = sshll.u32 [#allocation2], 4
      %s21 = int_to_ptr.vmem [resolvable:$true] %s20
      %26 = dma.hbm_to_vmem [thread:$0]  %s2, 7168, %s21, [#allocation3], 64, 64, 4
    $region13: #{intrinsic_critic_forward.1} parent=1 // pred_fallthru
      _
    // Predicated region
    $region14: #{intrinsic_critic_forward.1} parent=1 // pred_check
      _
    $region15: #{intrinsic_critic_forward.1} parent=1 // pred_check_branch
      %28 = sbr.rel (0) target = $region17
    $region16: #{intrinsic_critic_forward.1} parent=1 // pred_region
      _
    $region17: #{intrinsic_critic_forward.1} parent=1 // pred_fallthru
      _
    // Predicated region
    $region18: #{intrinsic_critic_forward.1} parent=1 // pred_check
      _
    $region19: #{intrinsic_critic_forward.1} parent=1 // pred_check_branch
      %30 = sbr.rel (0) target = $region21
    $region20: #{intrinsic_critic_forward.1} parent=1 // pred_region
      _
    $region21: #{intrinsic_critic_forward.1} parent=1 // pred_fallthru
      _
    // Predicated region
    $region22: #{intrinsic_critic_forward.1} parent=1 // pred_check
      _
    $region23: #{intrinsic_critic_forward.1} parent=1 // pred_check_branch
      %32 = sbr.rel (0) target = $region25
    $region24: #{intrinsic_critic_forward.1} parent=1 // pred_region
      %33 = dma.done [#allocation3], 7168
    $region25: #{intrinsic_critic_forward.1} parent=1 // pred_fallthru
      _
    %v35 = vlaneseq
    %v36 = vand.u32 %v35, 127
    %v37 = vld [vmem:[%s1] sm:$0xff]
    %38 = vset.pattern.permute.xlu0 0
    %39 = vperm.xlu0 %38, %v37
    %v40 = vpop.permute.xlu0 %39
    %vm41 = vcmp.eq.s32.totalorder %v36, %v40
    %v42 = vsel %vm41, 1, 0
    %v43 = vcvt.s32.f32 %v42
    %v44 = vpack.c.bf16 %v43, %v43
    %v45 = vld [vmem:[#allocation2] sm:$0xf]
    %v46 = vld [vmem:[#allocation2 + $0x4] sm:$0xf]
    %v47 = vld [vmem:[#allocation2 + $0x8] sm:$0xf]
    %v48 = vld [vmem:[#allocation2 + $0xc] sm:$0xf]
    %v49 = vld [vmem:[#allocation2 + $0x10] sm:$0xf]
    %v50 = vld [vmem:[#allocation2 + $0x14] sm:$0xf]
    %v51 = vld [vmem:[#allocation2 + $0x18] sm:$0xf]
    %v52 = vld [vmem:[#allocation2 + $0x1c] sm:$0xf]
    %v53 = vld [vmem:[#allocation2 + $0x20] sm:$0xf]
    %v54 = vld [vmem:[#allocation2 + $0x24] sm:$0xf]
    %v55 = vld [vmem:[#allocation2 + $0x28] sm:$0xf]
    %v56 = vld [vmem:[#allocation2 + $0x2c] sm:$0xf]
    %v57 = vld [vmem:[#allocation2 + $0x30] sm:$0xf]
    %v58 = vld [vmem:[#allocation2 + $0x34] sm:$0xf]
    %v59 = vld [vmem:[#allocation2 + $0x38] sm:$0xf]
    %v60 = vld [vmem:[#allocation2 + $0x3c] sm:$0xf]
    %v61 = vld [vmem:[%s4] sm:$0x1]
    %v62 = vlaneseq
    %v63 = vshrl.u32 %v62, 7
    %v64 = vsub.s32 0, %v63
    %v65 = vrot.slane %v61, %v64
    %v82 = vunpack.c.l.b16 %v45
    %v83 = vunpack.c.l.b16 %v46
    %v84 = vunpack.c.l.b16 %v47
    %v85 = vunpack.c.l.b16 %v48
    %v86 = vunpack.c.l.b16 %v49
    %v87 = vunpack.c.l.b16 %v50
    %v88 = vunpack.c.l.b16 %v51
    %v89 = vunpack.c.l.b16 %v52
    %v90 = vunpack.c.l.b16 %v53
    %v91 = vunpack.c.l.b16 %v54
    %v92 = vunpack.c.l.b16 %v55
    %v93 = vunpack.c.l.b16 %v56
    %v94 = vunpack.c.l.b16 %v57
    %v95 = vunpack.c.l.b16 %v58
    %v96 = vunpack.c.l.b16 %v59
    %v97 = vunpack.c.l.b16 %v60
    %v98 = vpack.c.b16 %v83, %v82
    %v99 = vpack.c.b16 %v85, %v84
    %v100 = vpack.c.b16 %v87, %v86
    %v101 = vpack.c.b16 %v89, %v88
    %v102 = vpack.c.b16 %v91, %v90
    %v103 = vpack.c.b16 %v93, %v92
    %v104 = vpack.c.b16 %v95, %v94
    %v105 = vpack.c.b16 %v97, %v96
    %114 = vmatprep.subr.bf16.mxu0 0
    %115 = vmatpush1.bf16.msra.mxu0 %v98
    %116 = vmatprep.subr.bf16.mxu0 0
    %117 = vmatpush1.bf16.msra.mxu0 %v99
    %118 = vmatprep.subr.bf16.mxu0 0
    %119 = vmatpush1.bf16.msra.mxu0 %v100
    %120 = vmatprep.subr.bf16.mxu0 0
    %121 = vmatpush1.bf16.msra.mxu0 %v101
    %122 = vmatprep.subr.bf16.mxu0 0
    %123 = vmatpush1.bf16.msra.mxu0 %v102
    %124 = vmatprep.subr.bf16.mxu0 0
    %125 = vmatpush1.bf16.msra.mxu0 %v103
    %126 = vmatprep.subr.bf16.mxu0 0
    %127 = vmatpush1.bf16.msra.mxu0 %v104
    %128 = vmatprep.subr.bf16.mxu0 0
    %129 = vmatpush1.bf16.msra.mxu0 %v105
    %130 = vmatprep.subr.bf16.mxu0 0
    %131 = vmatpush1.bf16.msra.mxu0 0
    %132 = vmatprep.subr.bf16.mxu0 0
    %133 = vmatpush1.bf16.msra.mxu0 0
    %134 = vmatprep.subr.bf16.mxu0 0
    %135 = vmatpush1.bf16.msra.mxu0 0
    %136 = vmatprep.subr.bf16.mxu0 0
    %137 = vmatpush1.bf16.msra.mxu0 0
    %138 = vmatprep.subr.bf16.mxu0 0
    %139 = vmatpush1.bf16.msra.mxu0 0
    %140 = vmatprep.subr.bf16.mxu0 0
    %141 = vmatpush1.bf16.msra.mxu0 0
    %142 = vmatprep.subr.bf16.mxu0 0
    %143 = vmatpush1.bf16.msra.mxu0 0
    %144 = vmatprep.subr.bf16.mxu0 0
    %145 = vmatpush1.bf16.msra.mxu0 0
    %146 = vmatprep.mubr.bf16.mxu0 0
    %147 = vmatmul.mubr.bf16.gmra.mrb[0].mxu0 %v44
    %v148 = vpop.f32.mrb[0].mxu0
    %v149 = vadd.f32 %v65, %v148
    %v150 = vpop.f32.mrb[0].mxu0
    %v151 = vpop.f32.mrb[0].mxu0
    %v152 = vpop.f32.mrb[0].mxu0
    %153 = vdwg.mxu0
    %vm154 = vcmp.gt.f32.partialorder %v149, 0.0
    %v155 = vmin.f32 %v149, 0.0
    %v156 = vmul.f32 %v155, 1.442695
    %v157 = vpow.pop %v156
    %v158 = vsub.f32 %v157, 1.0
    %v159 = vsel %vm154, %v149, %v158
    %v160 = vpack.c.bf16 %v159, %v159
    %s161 = scalar_lea.vmem [#allocation2], 64
    %v162 = vld [vmem:[%s161] sm:$0xf]
    %v163 = vld [vmem:[%s161 + $0x4] sm:$0xf]
    %v164 = vld [vmem:[%s161 + $0x8] sm:$0xf]
    %v165 = vld [vmem:[%s161 + $0xc] sm:$0xf]
    %v166 = vld [vmem:[%s161 + $0x10] sm:$0xf]
    %v167 = vld [vmem:[%s161 + $0x14] sm:$0xf]
    %v168 = vld [vmem:[%s161 + $0x18] sm:$0xf]
    %v169 = vld [vmem:[%s161 + $0x1c] sm:$0xf]
    %v170 = vld [vmem:[%s161 + $0x20] sm:$0xf]
    %v171 = vld [vmem:[%s161 + $0x24] sm:$0xf]
    %v172 = vld [vmem:[%s161 + $0x28] sm:$0xf]
    %v173 = vld [vmem:[%s161 + $0x2c] sm:$0xf]
    %v174 = vld [vmem:[%s161 + $0x30] sm:$0xf]
    %v175 = vld [vmem:[%s161 + $0x34] sm:$0xf]
    %v176 = vld [vmem:[%s161 + $0x38] sm:$0xf]
    %v177 = vld [vmem:[%s161 + $0x3c] sm:$0xf]
    %v178 = vld [vmem:[%s4 + $0x1] sm:$0x1]
    %v179 = vlaneseq
    %v180 = vshrl.u32 %v179, 7
    %v181 = vsub.s32 0, %v180
    %v182 = vrot.slane %v178, %v181
    %v199 = vunpack.c.l.b16 %v162
    %v200 = vunpack.c.l.b16 %v163
    %v201 = vunpack.c.l.b16 %v164
    %v202 = vunpack.c.l.b16 %v165
    %v203 = vunpack.c.l.b16 %v166
    %v204 = vunpack.c.l.b16 %v167
    %v205 = vunpack.c.l.b16 %v168
    %v206 = vunpack.c.l.b16 %v169
    %v207 = vunpack.c.l.b16 %v170
    %v208 = vunpack.c.l.b16 %v171
    %v209 = vunpack.c.l.b16 %v172
    %v210 = vunpack.c.l.b16 %v173
    %v211 = vunpack.c.l.b16 %v174
    %v212 = vunpack.c.l.b16 %v175
    %v213 = vunpack.c.l.b16 %v176
    %v214 = vunpack.c.l.b16 %v177
    %v215 = vpack.c.b16 %v200, %v199
    %v216 = vpack.c.b16 %v202, %v201
    %v217 = vpack.c.b16 %v204, %v203
    %v218 = vpack.c.b16 %v206, %v205
    %v219 = vpack.c.b16 %v208, %v207
    %v220 = vpack.c.b16 %v210, %v209
    %v221 = vpack.c.b16 %v212, %v211
    %v222 = vpack.c.b16 %v214, %v213
    %231 = vmatprep.subr.bf16.mxu0 0
    %232 = vmatpush1.bf16.msra.mxu0 %v215
    %233 = vmatprep.subr.bf16.mxu0 0
    %234 = vmatpush1.bf16.msra.mxu0 %v216
    %235 = vmatprep.subr.bf16.mxu0 0
    %236 = vmatpush1.bf16.msra.mxu0 %v217
    %237 = vmatprep.subr.bf16.mxu0 0
    %238 = vmatpush1.bf16.msra.mxu0 %v218
    %239 = vmatprep.subr.bf16.mxu0 0
    %240 = vmatpush1.bf16.msra.mxu0 %v219
    %241 = vmatprep.subr.bf16.mxu0 0
    %242 = vmatpush1.bf16.msra.mxu0 %v220
    %243 = vmatprep.subr.bf16.mxu0 0
    %244 = vmatpush1.bf16.msra.mxu0 %v221
    %245 = vmatprep.subr.bf16.mxu0 0
    %246 = vmatpush1.bf16.msra.mxu0 %v222
    %247 = vmatprep.subr.bf16.mxu0 0
    %248 = vmatpush1.bf16.msra.mxu0 0
    %249 = vmatprep.subr.bf16.mxu0 0
    %250 = vmatpush1.bf16.msra.mxu0 0
    %251 = vmatprep.subr.bf16.mxu0 0
    %252 = vmatpush1.bf16.msra.mxu0 0
    %253 = vmatprep.subr.bf16.mxu0 0
    %254 = vmatpush1.bf16.msra.mxu0 0
    %255 = vmatprep.subr.bf16.mxu0 0
    %256 = vmatpush1.bf16.msra.mxu0 0
    %257 = vmatprep.subr.bf16.mxu0 0
    %258 = vmatpush1.bf16.msra.mxu0 0
    %259 = vmatprep.subr.bf16.mxu0 0
    %260 = vmatpush1.bf16.msra.mxu0 0
    %261 = vmatprep.subr.bf16.mxu0 0
    %262 = vmatpush1.bf16.msra.mxu0 0
    %263 = vmatprep.mubr.bf16.mxu0 0
    %264 = vmatmul.mubr.bf16.gmra.mrb[0].mxu0 %v160
    %v265 = vpop.f32.mrb[0].mxu0
    %v266 = vadd.f32 %v182, %v265
    %v267 = vpop.f32.mrb[0].mxu0
    %v268 = vpop.f32.mrb[0].mxu0
    %v269 = vpop.f32.mrb[0].mxu0
    %270 = vdwg.mxu0
    %vm271 = vcmp.gt.f32.partialorder %v266, 0.0
    %v272 = vmin.f32 %v266, 0.0
    %v273 = vmul.f32 %v272, 1.442695
    %v274 = vpow.pop %v273
    %v275 = vsub.f32 %v274, 1.0
    %v276 = vsel %vm271, %v266, %v275
    %v277 = vpack.c.bf16 %v276, %v276
    %s278 = scalar_lea.vmem [#allocation2], 128
    %v279 = vld [vmem:[%s278] sm:$0xf]
    %v280 = vld [vmem:[%s278 + $0x4] sm:$0xf]
    %v281 = vld [vmem:[%s278 + $0x8] sm:$0xf]
    %v282 = vld [vmem:[%s278 + $0xc] sm:$0xf]
    %v283 = vld [vmem:[%s278 + $0x10] sm:$0xf]
    %v284 = vld [vmem:[%s278 + $0x14] sm:$0xf]
    %v285 = vld [vmem:[%s278 + $0x18] sm:$0xf]
    %v286 = vld [vmem:[%s278 + $0x1c] sm:$0xf]
    %v287 = vld [vmem:[%s278 + $0x20] sm:$0xf]
    %v288 = vld [vmem:[%s278 + $0x24] sm:$0xf]
    %v289 = vld [vmem:[%s278 + $0x28] sm:$0xf]
    %v290 = vld [vmem:[%s278 + $0x2c] sm:$0xf]
    %v291 = vld [vmem:[%s278 + $0x30] sm:$0xf]
    %v292 = vld [vmem:[%s278 + $0x34] sm:$0xf]
    %v293 = vld [vmem:[%s278 + $0x38] sm:$0xf]
    %v294 = vld [vmem:[%s278 + $0x3c] sm:$0xf]
    %v295 = vld [vmem:[%s4 + $0x2] sm:$0x1]
    %v296 = vlaneseq
    %v297 = vshrl.u32 %v296, 7
    %v298 = vsub.s32 0, %v297
    %v299 = vrot.slane %v295, %v298
    %v316 = vunpack.c.l.b16 %v279
    %v317 = vunpack.c.l.b16 %v280
    %v318 = vunpack.c.l.b16 %v281
    %v319 = vunpack.c.l.b16 %v282
    %v320 = vunpack.c.l.b16 %v283
    %v321 = vunpack.c.l.b16 %v284
    %v322 = vunpack.c.l.b16 %v285
    %v323 = vunpack.c.l.b16 %v286
    %v324 = vunpack.c.l.b16 %v287
    %v325 = vunpack.c.l.b16 %v288
    %v326 = vunpack.c.l.b16 %v289
    %v327 = vunpack.c.l.b16 %v290
    %v328 = vunpack.c.l.b16 %v291
    %v329 = vunpack.c.l.b16 %v292
    %v330 = vunpack.c.l.b16 %v293
    %v331 = vunpack.c.l.b16 %v294
    %v332 = vpack.c.b16 %v317, %v316
    %v333 = vpack.c.b16 %v319, %v318
    %v334 = vpack.c.b16 %v321, %v320
    %v335 = vpack.c.b16 %v323, %v322
    %v336 = vpack.c.b16 %v325, %v324
    %v337 = vpack.c.b16 %v327, %v326
    %v338 = vpack.c.b16 %v329, %v328
    %v339 = vpack.c.b16 %v331, %v330
    %348 = vmatprep.subr.bf16.mxu0 0
    %349 = vmatpush1.bf16.msra.mxu0 %v332
    %350 = vmatprep.subr.bf16.mxu0 0
    %351 = vmatpush1.bf16.msra.mxu0 %v333
    %352 = vmatprep.subr.bf16.mxu0 0
    %353 = vmatpush1.bf16.msra.mxu0 %v334
    %354 = vmatprep.subr.bf16.mxu0 0
    %355 = vmatpush1.bf16.msra.mxu0 %v335
    %356 = vmatprep.subr.bf16.mxu0 0
    %357 = vmatpush1.bf16.msra.mxu0 %v336
    %358 = vmatprep.subr.bf16.mxu0 0
    %359 = vmatpush1.bf16.msra.mxu0 %v337
    %360 = vmatprep.subr.bf16.mxu0 0
    %361 = vmatpush1.bf16.msra.mxu0 %v338
    %362 = vmatprep.subr.bf16.mxu0 0
    %363 = vmatpush1.bf16.msra.mxu0 %v339
    %364 = vmatprep.subr.bf16.mxu0 0
    %365 = vmatpush1.bf16.msra.mxu0 0
    %366 = vmatprep.subr.bf16.mxu0 0
    %367 = vmatpush1.bf16.msra.mxu0 0
    %368 = vmatprep.subr.bf16.mxu0 0
    %369 = vmatpush1.bf16.msra.mxu0 0
    %370 = vmatprep.subr.bf16.mxu0 0
    %371 = vmatpush1.bf16.msra.mxu0 0
    %372 = vmatprep.subr.bf16.mxu0 0
    %373 = vmatpush1.bf16.msra.mxu0 0
    %374 = vmatprep.subr.bf16.mxu0 0
    %375 = vmatpush1.bf16.msra.mxu0 0
    %376 = vmatprep.subr.bf16.mxu0 0
    %377 = vmatpush1.bf16.msra.mxu0 0
    %378 = vmatprep.subr.bf16.mxu0 0
    %379 = vmatpush1.bf16.msra.mxu0 0
    %380 = vmatprep.mubr.bf16.mxu0 0
    %381 = vmatmul.mubr.bf16.gmra.mrb[0].mxu0 %v277
    %v382 = vpop.f32.mrb[0].mxu0
    %v383 = vadd.f32 %v299, %v382
    %v384 = vpop.f32.mrb[0].mxu0
    %v385 = vpop.f32.mrb[0].mxu0
    %v386 = vpop.f32.mrb[0].mxu0
    %387 = vdwg.mxu0
    %vm388 = vcmp.gt.f32.partialorder %v383, 0.0
    %v389 = vmin.f32 %v383, 0.0
    %v390 = vmul.f32 %v389, 1.442695
    %v391 = vpow.pop %v390
    %v392 = vsub.f32 %v391, 1.0
    %v393 = vsel %vm388, %v383, %v392
    %v394 = vld [vmem:[%s0] sm:$0xff]
    %v395 = vpack.c.bf16 %v394, %v394
    %s396 = scalar_lea.vmem [#allocation2], 192
    %v397 = vld [vmem:[%s396] sm:$0xf]
    %v398 = vld [vmem:[%s396 + $0x4] sm:$0xf]
    %v399 = vld [vmem:[%s396 + $0x8] sm:$0xf]
    %v400 = vld [vmem:[%s396 + $0xc] sm:$0xf]
    %v401 = vpack.c.bf16 %v393, %v393
    %s402 = scalar_lea.vmem [#allocation2], 256
    %v403 = vld [vmem:[%s402] sm:$0xf]
    %v404 = vld [vmem:[%s402 + $0x4] sm:$0xf]
    %v405 = vld [vmem:[%s402 + $0x8] sm:$0xf]
    %v406 = vld [vmem:[%s402 + $0xc] sm:$0xf]
    %v407 = vld [vmem:[%s402 + $0x10] sm:$0xf]
    %v408 = vld [vmem:[%s402 + $0x14] sm:$0xf]
    %v409 = vld [vmem:[%s402 + $0x18] sm:$0xf]
    %v410 = vld [vmem:[%s402 + $0x1c] sm:$0xf]
    %v411 = vld [vmem:[%s402 + $0x20] sm:$0xf]
    %v412 = vld [vmem:[%s402 + $0x24] sm:$0xf]
    %v413 = vld [vmem:[%s402 + $0x28] sm:$0xf]
    %v414 = vld [vmem:[%s402 + $0x2c] sm:$0xf]
    %v415 = vld [vmem:[%s402 + $0x30] sm:$0xf]
    %v416 = vld [vmem:[%s402 + $0x34] sm:$0xf]
    %v417 = vld [vmem:[%s402 + $0x38] sm:$0xf]
    %v418 = vld [vmem:[%s402 + $0x3c] sm:$0xf]
    %v435 = vunpack.c.l.b16 %v403
    %v436 = vunpack.c.l.b16 %v404
    %v437 = vunpack.c.l.b16 %v405
    %v438 = vunpack.c.l.b16 %v406
    %v439 = vunpack.c.l.b16 %v407
    %v440 = vunpack.c.l.b16 %v408
    %v441 = vunpack.c.l.b16 %v409
    %v442 = vunpack.c.l.b16 %v410
    %v443 = vunpack.c.l.b16 %v411
    %v444 = vunpack.c.l.b16 %v412
    %v445 = vunpack.c.l.b16 %v413
    %v446 = vunpack.c.l.b16 %v414
    %v447 = vunpack.c.l.b16 %v415
    %v448 = vunpack.c.l.b16 %v416
    %v449 = vunpack.c.l.b16 %v417
    %v450 = vunpack.c.l.b16 %v418
    %v451 = vpack.c.b16 %v436, %v435
    %v452 = vpack.c.b16 %v438, %v437
    %v453 = vpack.c.b16 %v440, %v439
    %v454 = vpack.c.b16 %v442, %v441
    %v455 = vpack.c.b16 %v444, %v443
    %v456 = vpack.c.b16 %v446, %v445
    %v457 = vpack.c.b16 %v448, %v447
    %v458 = vpack.c.b16 %v450, %v449
    %467 = vmatprep.subr.bf16.mxu0 0
    %468 = vmatpush1.bf16.msra.mxu0 %v451
    %469 = vmatprep.subr.bf16.mxu0 0
    %470 = vmatpush1.bf16.msra.mxu0 %v452
    %471 = vmatprep.subr.bf16.mxu0 0
    %472 = vmatpush1.bf16.msra.mxu0 %v453
    %473 = vmatprep.subr.bf16.mxu0 0
    %474 = vmatpush1.bf16.msra.mxu0 %v454
    %475 = vmatprep.subr.bf16.mxu0 0
    %476 = vmatpush1.bf16.msra.mxu0 %v455
    %477 = vmatprep.subr.bf16.mxu0 0
    %478 = vmatpush1.bf16.msra.mxu0 %v456
    %479 = vmatprep.subr.bf16.mxu0 0
    %480 = vmatpush1.bf16.msra.mxu0 %v457
    %481 = vmatprep.subr.bf16.mxu0 0
    %482 = vmatpush1.bf16.msra.mxu0 %v458
    %483 = vmatprep.subr.bf16.mxu0 0
    %484 = vmatpush1.bf16.msra.mxu0 0
    %485 = vmatprep.subr.bf16.mxu0 0
    %486 = vmatpush1.bf16.msra.mxu0 0
    %487 = vmatprep.subr.bf16.mxu0 0
    %488 = vmatpush1.bf16.msra.mxu0 0
    %489 = vmatprep.subr.bf16.mxu0 0
    %490 = vmatpush1.bf16.msra.mxu0 0
    %491 = vmatprep.subr.bf16.mxu0 0
    %492 = vmatpush1.bf16.msra.mxu0 0
    %493 = vmatprep.subr.bf16.mxu0 0
    %494 = vmatpush1.bf16.msra.mxu0 0
    %495 = vmatprep.subr.bf16.mxu0 0
    %496 = vmatpush1.bf16.msra.mxu0 0
    %497 = vmatprep.subr.bf16.mxu0 0
    %498 = vmatpush1.bf16.msra.mxu0 0
    %499 = vmatprep.mubr.bf16.mxu0 0
    %500 = vmatmul.mubr.bf16.gmra.mrb[0].mxu0 %v401
    %v501 = vpop.f32.mrb[0].mxu0
    %v502 = vadd.f32 0.0, %v501
    %v503 = vpop.f32.mrb[0].mxu0
    %v504 = vpop.f32.mrb[0].mxu0
    %v505 = vpop.f32.mrb[0].mxu0
    %506 = vdwg.mxu0
    %v511 = vunpack.c.l.b16 %v397
    %v512 = vunpack.c.l.b16 %v398
    %v513 = vunpack.c.l.b16 %v399
    %v514 = vunpack.c.l.b16 %v400
    %v515 = vpack.c.b16 %v512, %v511
    %v516 = vpack.c.b16 %v514, %v513
    %vm519 = vcmask 261120
    %v521 = vsel %vm519, %v395, 0
    %523 = vmatprep.subr.bf16.mxu0 0
    %524 = vmatpush1.bf16.msra.mxu0 %v515
    %525 = vmatprep.subr.bf16.mxu0 0
    %526 = vmatpush1.bf16.msra.mxu0 %v516
    %527 = vmatprep.subr.bf16.mxu0 0
    %528 = vmatpush1.bf16.msra.mxu0 0
    %529 = vmatprep.subr.bf16.mxu0 0
    %530 = vmatpush1.bf16.msra.mxu0 0
    %531 = vmatprep.subr.bf16.mxu0 0
    %532 = vmatpush1.bf16.msra.mxu0 0
    %533 = vmatprep.subr.bf16.mxu0 0
    %534 = vmatpush1.bf16.msra.mxu0 0
    %535 = vmatprep.subr.bf16.mxu0 0
    %536 = vmatpush1.bf16.msra.mxu0 0
    %537 = vmatprep.subr.bf16.mxu0 0
    %538 = vmatpush1.bf16.msra.mxu0 0
    %539 = vmatprep.subr.bf16.mxu0 0
    %540 = vmatpush1.bf16.msra.mxu0 0
    %541 = vmatprep.subr.bf16.mxu0 0
    %542 = vmatpush1.bf16.msra.mxu0 0
    %543 = vmatprep.subr.bf16.mxu0 0
    %544 = vmatpush1.bf16.msra.mxu0 0
    %545 = vmatprep.subr.bf16.mxu0 0
    %546 = vmatpush1.bf16.msra.mxu0 0
    %547 = vmatprep.subr.bf16.mxu0 0
    %548 = vmatpush1.bf16.msra.mxu0 0
    %549 = vmatprep.subr.bf16.mxu0 0
    %550 = vmatpush1.bf16.msra.mxu0 0
    %551 = vmatprep.subr.bf16.mxu0 0
    %552 = vmatpush1.bf16.msra.mxu0 0
    %553 = vmatprep.subr.bf16.mxu0 0
    %554 = vmatpush1.bf16.msra.mxu0 0
    %555 = vmatprep.mubr.bf16.mxu0 0
    %556 = vmatmul.mubr.bf16.gmra.mrb[0].mxu0 %v521
    %v557 = vpop.f32.mrb[0].mxu0
    %v558 = vadd.f32 %v502, %v557
    %v559 = vpop.f32.mrb[0].mxu0
    %v560 = vpop.f32.mrb[0].mxu0
    %v561 = vpop.f32.mrb[0].mxu0
    %562 = vdwg.mxu0
    %v563 = vld [vmem:[%s4 + $0x3] sm:$0x1]
    %v564 = vlaneseq
    %v565 = vshrl.u32 %v564, 7
    %v566 = vsub.s32 0, %v565
    %v567 = vrot.slane %v563, %v566
    %v568 = vadd.f32 %v558, %v567
    %vm569 = vcmp.gt.f32.partialorder %v568, 0.0
    %v570 = vmin.f32 %v568, 0.0
    %v571 = vmul.f32 %v570, 1.442695
    %v572 = vpow.pop %v571
    %v573 = vsub.f32 %v572, 1.0
    %v574 = vsel %vm569, %v568, %v573
    %v575 = vpack.c.bf16 %v574, %v574
    %s576 = scalar_lea.vmem [#allocation2], 320
    %v577 = vld [vmem:[%s576] sm:$0xf]
    %v578 = vld [vmem:[%s576 + $0x4] sm:$0xf]
    %v579 = vld [vmem:[%s576 + $0x8] sm:$0xf]
    %v580 = vld [vmem:[%s576 + $0xc] sm:$0xf]
    %v581 = vld [vmem:[%s576 + $0x10] sm:$0xf]
    %v582 = vld [vmem:[%s576 + $0x14] sm:$0xf]
    %v583 = vld [vmem:[%s576 + $0x18] sm:$0xf]
    %v584 = vld [vmem:[%s576 + $0x1c] sm:$0xf]
    %v585 = vld [vmem:[%s576 + $0x20] sm:$0xf]
    %v586 = vld [vmem:[%s576 + $0x24] sm:$0xf]
    %v587 = vld [vmem:[%s576 + $0x28] sm:$0xf]
    %v588 = vld [vmem:[%s576 + $0x2c] sm:$0xf]
    %v589 = vld [vmem:[%s576 + $0x30] sm:$0xf]
    %v590 = vld [vmem:[%s576 + $0x34] sm:$0xf]
    %v591 = vld [vmem:[%s576 + $0x38] sm:$0xf]
    %v592 = vld [vmem:[%s576 + $0x3c] sm:$0xf]
    %v593 = vld [vmem:[%s4 + $0x5] sm:$0x1]
    %v594 = vlaneseq
    %v595 = vshrl.u32 %v594, 7
    %v596 = vsub.s32 0, %v595
    %v597 = vrot.slane %v593, %v596
    %v614 = vunpack.c.l.b16 %v577
    %v615 = vunpack.c.l.b16 %v578
    %v616 = vunpack.c.l.b16 %v579
    %v617 = vunpack.c.l.b16 %v580
    %v618 = vunpack.c.l.b16 %v581
    %v619 = vunpack.c.l.b16 %v582
    %v620 = vunpack.c.l.b16 %v583
    %v621 = vunpack.c.l.b16 %v584
    %v622 = vunpack.c.l.b16 %v585
    %v623 = vunpack.c.l.b16 %v586
    %v624 = vunpack.c.l.b16 %v587
    %v625 = vunpack.c.l.b16 %v588
    %v626 = vunpack.c.l.b16 %v589
    %v627 = vunpack.c.l.b16 %v590
    %v628 = vunpack.c.l.b16 %v591
    %v629 = vunpack.c.l.b16 %v592
    %v630 = vpack.c.b16 %v615, %v614
    %v631 = vpack.c.b16 %v617, %v616
    %v632 = vpack.c.b16 %v619, %v618
    %v633 = vpack.c.b16 %v621, %v620
    %v634 = vpack.c.b16 %v623, %v622
    %v635 = vpack.c.b16 %v625, %v624
    %v636 = vpack.c.b16 %v627, %v626
    %v637 = vpack.c.b16 %v629, %v628
    %646 = vmatprep.subr.bf16.mxu0 0
    %647 = vmatpush1.bf16.msra.mxu0 %v630
    %648 = vmatprep.subr.bf16.mxu0 0
    %649 = vmatpush1.bf16.msra.mxu0 %v631
    %650 = vmatprep.subr.bf16.mxu0 0
    %651 = vmatpush1.bf16.msra.mxu0 %v632
    %652 = vmatprep.subr.bf16.mxu0 0
    %653 = vmatpush1.bf16.msra.mxu0 %v633
    %654 = vmatprep.subr.bf16.mxu0 0
    %655 = vmatpush1.bf16.msra.mxu0 %v634
    %656 = vmatprep.subr.bf16.mxu0 0
    %657 = vmatpush1.bf16.msra.mxu0 %v635
    %658 = vmatprep.subr.bf16.mxu0 0
    %659 = vmatpush1.bf16.msra.mxu0 %v636
    %660 = vmatprep.subr.bf16.mxu0 0
    %661 = vmatpush1.bf16.msra.mxu0 %v637
    %662 = vmatprep.subr.bf16.mxu0 0
    %663 = vmatpush1.bf16.msra.mxu0 0
    %664 = vmatprep.subr.bf16.mxu0 0
    %665 = vmatpush1.bf16.msra.mxu0 0
    %666 = vmatprep.subr.bf16.mxu0 0
    %667 = vmatpush1.bf16.msra.mxu0 0
    %668 = vmatprep.subr.bf16.mxu0 0
    %669 = vmatpush1.bf16.msra.mxu0 0
    %670 = vmatprep.subr.bf16.mxu0 0
    %671 = vmatpush1.bf16.msra.mxu0 0
    %672 = vmatprep.subr.bf16.mxu0 0
    %673 = vmatpush1.bf16.msra.mxu0 0
    %674 = vmatprep.subr.bf16.mxu0 0
    %675 = vmatpush1.bf16.msra.mxu0 0
    %676 = vmatprep.subr.bf16.mxu0 0
    %677 = vmatpush1.bf16.msra.mxu0 0
    %678 = vmatprep.mubr.bf16.mxu0 0
    %679 = vmatmul.mubr.bf16.gmra.mrb[0].mxu0 %v575
    %v680 = vpop.f32.mrb[0].mxu0
    %v681 = vadd.f32 %v597, %v680
    %v682 = vpop.f32.mrb[0].mxu0
    %v683 = vpop.f32.mrb[0].mxu0
    %v684 = vpop.f32.mrb[0].mxu0
    %685 = vdwg.mxu0
    %vm686 = vcmp.gt.f32.partialorder %v681, 0.0
    %v687 = vmin.f32 %v681, 0.0
    %v688 = vmul.f32 %v687, 1.442695
    %v689 = vpow.pop %v688
    %v690 = vsub.f32 %v689, 1.0
    %v691 = vsel %vm686, %v681, %v690
    %v692 = vpack.c.bf16 %v691, %v691
    %s693 = scalar_lea.vmem [#allocation2], 384
    %v694 = vld [vmem:[%s693] sm:$0xf]
    %v695 = vld [vmem:[%s693 + $0x4] sm:$0xf]
    %v696 = vld [vmem:[%s693 + $0x8] sm:$0xf]
    %v697 = vld [vmem:[%s693 + $0xc] sm:$0xf]
    %v698 = vld [vmem:[%s693 + $0x10] sm:$0xf]
    %v699 = vld [vmem:[%s693 + $0x14] sm:$0xf]
    %v700 = vld [vmem:[%s693 + $0x18] sm:$0xf]
    %v701 = vld [vmem:[%s693 + $0x1c] sm:$0xf]
    %v702 = vld [vmem:[%s693 + $0x20] sm:$0xf]
    %v703 = vld [vmem:[%s693 + $0x24] sm:$0xf]
    %v704 = vld [vmem:[%s693 + $0x28] sm:$0xf]
    %v705 = vld [vmem:[%s693 + $0x2c] sm:$0xf]
    %v706 = vld [vmem:[%s693 + $0x30] sm:$0xf]
    %v707 = vld [vmem:[%s693 + $0x34] sm:$0xf]
    %v708 = vld [vmem:[%s693 + $0x38] sm:$0xf]
    %v709 = vld [vmem:[%s693 + $0x3c] sm:$0xf]
    %v710 = vld [vmem:[%s4 + $0x6] sm:$0x1]
    %v711 = vlaneseq
    %v712 = vshrl.u32 %v711, 7
    %v713 = vsub.s32 0, %v712
    %v714 = vrot.slane %v710, %v713
    %v731 = vunpack.c.l.b16 %v694
    %v732 = vunpack.c.l.b16 %v695
    %v733 = vunpack.c.l.b16 %v696
    %v734 = vunpack.c.l.b16 %v697
    %v735 = vunpack.c.l.b16 %v698
    %v736 = vunpack.c.l.b16 %v699
    %v737 = vunpack.c.l.b16 %v700
    %v738 = vunpack.c.l.b16 %v701
    %v739 = vunpack.c.l.b16 %v702
    %v740 = vunpack.c.l.b16 %v703
    %v741 = vunpack.c.l.b16 %v704
    %v742 = vunpack.c.l.b16 %v705
    %v743 = vunpack.c.l.b16 %v706
    %v744 = vunpack.c.l.b16 %v707
    %v745 = vunpack.c.l.b16 %v708
    %v746 = vunpack.c.l.b16 %v709
    %v747 = vpack.c.b16 %v732, %v731
    %v748 = vpack.c.b16 %v734, %v733
    %v749 = vpack.c.b16 %v736, %v735
    %v750 = vpack.c.b16 %v738, %v737
    %v751 = vpack.c.b16 %v740, %v739
    %v752 = vpack.c.b16 %v742, %v741
    %v753 = vpack.c.b16 %v744, %v743
    %v754 = vpack.c.b16 %v746, %v745
    %763 = vmatprep.subr.bf16.mxu0 0
    %764 = vmatpush1.bf16.msra.mxu0 %v747
    %765 = vmatprep.subr.bf16.mxu0 0
    %766 = vmatpush1.bf16.msra.mxu0 %v748
    %767 = vmatprep.subr.bf16.mxu0 0
    %768 = vmatpush1.bf16.msra.mxu0 %v749
    %769 = vmatprep.subr.bf16.mxu0 0
    %770 = vmatpush1.bf16.msra.mxu0 %v750
    %771 = vmatprep.subr.bf16.mxu0 0
    %772 = vmatpush1.bf16.msra.mxu0 %v751
    %773 = vmatprep.subr.bf16.mxu0 0
    %774 = vmatpush1.bf16.msra.mxu0 %v752
    %775 = vmatprep.subr.bf16.mxu0 0
    %776 = vmatpush1.bf16.msra.mxu0 %v753
    %777 = vmatprep.subr.bf16.mxu0 0
    %778 = vmatpush1.bf16.msra.mxu0 %v754
    %779 = vmatprep.subr.bf16.mxu0 0
    %780 = vmatpush1.bf16.msra.mxu0 0
    %781 = vmatprep.subr.bf16.mxu0 0
    %782 = vmatpush1.bf16.msra.mxu0 0
    %783 = vmatprep.subr.bf16.mxu0 0
    %784 = vmatpush1.bf16.msra.mxu0 0
    %785 = vmatprep.subr.bf16.mxu0 0
    %786 = vmatpush1.bf16.msra.mxu0 0
    %787 = vmatprep.subr.bf16.mxu0 0
    %788 = vmatpush1.bf16.msra.mxu0 0
    %789 = vmatprep.subr.bf16.mxu0 0
    %790 = vmatpush1.bf16.msra.mxu0 0
    %791 = vmatprep.subr.bf16.mxu0 0
    %792 = vmatpush1.bf16.msra.mxu0 0
    %793 = vmatprep.subr.bf16.mxu0 0
    %794 = vmatpush1.bf16.msra.mxu0 0
    %795 = vmatprep.mubr.bf16.mxu0 0
    %796 = vmatmul.mubr.bf16.gmra.mrb[0].mxu0 %v692
    %v797 = vpop.f32.mrb[0].mxu0
    %v798 = vadd.f32 %v714, %v797
    %v799 = vpop.f32.mrb[0].mxu0
    %v800 = vpop.f32.mrb[0].mxu0
    %v801 = vpop.f32.mrb[0].mxu0
    %802 = vdwg.mxu0
    %vm803 = vcmp.gt.f32.partialorder %v798, 0.0
    %v804 = vmin.f32 %v798, 0.0
    %v805 = vmul.f32 %v804, 1.442695
    %v806 = vpow.pop %v805
    %v807 = vsub.f32 %v806, 1.0
    %v808 = vsel %vm803, %v798, %v807
    %809 = vxpose.xlu0.b32.start [1/16] %v808, 128
    %810 = vxpose.xlu0.b32.cont [2/16] 0.0, 128
    %811 = vxpose.xlu0.b32.cont [3/16] 0.0, 128
    %812 = vxpose.xlu0.b32.cont [4/16] 0.0, 128
    %813 = vxpose.xlu0.b32.cont [5/16] 0.0, 128
    %814 = vxpose.xlu0.b32.cont [6/16] 0.0, 128
    %815 = vxpose.xlu0.b32.cont [7/16] 0.0, 128
    %816 = vxpose.xlu0.b32.cont [8/16] 0.0, 128
    %817 = vxpose.xlu0.b32.cont [9/16] 0.0, 128
    %818 = vxpose.xlu0.b32.cont [10/16] 0.0, 128
    %819 = vxpose.xlu0.b32.cont [11/16] 0.0, 128
    %820 = vxpose.xlu0.b32.cont [12/16] 0.0, 128
    %821 = vxpose.xlu0.b32.cont [13/16] 0.0, 128
    %822 = vxpose.xlu0.b32.cont [14/16] 0.0, 128
    %823 = vxpose.xlu0.b32.cont [15/16] 0.0, 128
    %824 = vxpose.xlu0.b32.end [16/16] 0.0, 128
    %v825 = vpop.trf.xlu0
    %v826 = vpop.trf.xlu0
    %v827 = vpop.trf.xlu0
    %v828 = vpop.trf.xlu0
    %v829 = vpop.trf.xlu0
    %v830 = vpop.trf.xlu0
    %v831 = vpop.trf.xlu0
    %v832 = vpop.trf.xlu0
    %v833 = vpop.trf.xlu0
    %v834 = vpop.trf.xlu0
    %v835 = vpop.trf.xlu0
    %v836 = vpop.trf.xlu0
    %v837 = vpop.trf.xlu0
    %v838 = vpop.trf.xlu0
    %v839 = vpop.trf.xlu0
    %v840 = vpop.trf.xlu0
    %v841 = vpack.c.bf16 %v826, %v825
    %v842 = vpack.c.bf16 %v828, %v827
    %v843 = vpack.c.bf16 %v830, %v829
    %v844 = vpack.c.bf16 %v832, %v831
    %v845 = vpack.c.bf16 %v834, %v833
    %v846 = vpack.c.bf16 %v836, %v835
    %v847 = vpack.c.bf16 %v838, %v837
    %v848 = vpack.c.bf16 %v840, %v839
    %v849 = vld [vmem:[%s3] sm:$0xf]
    %v850 = vld [vmem:[%s4 + $0x7] sm:$0x1]
    %s852 = vtos %v850
    %v853 = vstv %s852
    %855 = vmatprep.subr.bf16.mxu0 0
    %856 = vmatpush1.bf16.msra.mxu0 %v841
    %857 = vmatprep.subr.bf16.mxu0 0
    %858 = vmatpush1.bf16.msra.mxu0 %v842
    %859 = vmatprep.subr.bf16.mxu0 0
    %860 = vmatpush1.bf16.msra.mxu0 %v843
    %861 = vmatprep.subr.bf16.mxu0 0
    %862 = vmatpush1.bf16.msra.mxu0 %v844
    %863 = vmatprep.subr.bf16.mxu0 0
    %864 = vmatpush1.bf16.msra.mxu0 %v845
    %865 = vmatprep.subr.bf16.mxu0 0
    %866 = vmatpush1.bf16.msra.mxu0 %v846
    %867 = vmatprep.subr.bf16.mxu0 0
    %868 = vmatpush1.bf16.msra.mxu0 %v847
    %869 = vmatprep.subr.bf16.mxu0 0
    %870 = vmatpush1.bf16.msra.mxu0 %v848
    %871 = vmatprep.subr.bf16.mxu0 0
    %872 = vmatpush1.bf16.msra.mxu0 0
    %873 = vmatprep.subr.bf16.mxu0 0
    %874 = vmatpush1.bf16.msra.mxu0 0
    %875 = vmatprep.subr.bf16.mxu0 0
    %876 = vmatpush1.bf16.msra.mxu0 0
    %877 = vmatprep.subr.bf16.mxu0 0
    %878 = vmatpush1.bf16.msra.mxu0 0
    %879 = vmatprep.subr.bf16.mxu0 0
    %880 = vmatpush1.bf16.msra.mxu0 0
    %881 = vmatprep.subr.bf16.mxu0 0
    %882 = vmatpush1.bf16.msra.mxu0 0
    %883 = vmatprep.subr.bf16.mxu0 0
    %884 = vmatpush1.bf16.msra.mxu0 0
    %885 = vmatprep.subr.bf16.mxu0 0
    %886 = vmatpush1.bf16.msra.mxu0 0
    %887 = vmatprep.mubr.bf16.mxu0 0
    %888 = vmatmul.mubr.bf16.gmra.mrb[0].mxu0 %v849
    %v889 = vpop.f32.mrb[0].mxu0
    %v890 = vadd.f32 %v853, %v889
    %v891 = vpop.f32.mrb[0].mxu0
    %v892 = vpop.f32.mrb[0].mxu0
    %v893 = vpop.f32.mrb[0].mxu0
    %894 = vdwg.mxu0
    %vm895 = vcmask 64512
    %896 = vst.msk [vmem:[%s5] sm:$0xff] %vm895, %v890
    // Predicated region
    $region26: #{intrinsic_critic_forward.1} parent=1 // pred_check
      _
    $region27: #{intrinsic_critic_forward.1} parent=1 // pred_check_branch
      %898 = sbr.rel (0) target = $region29
    $region28: #{intrinsic_critic_forward.1} parent=1 // pred_region
      _
    $region29: #{intrinsic_critic_forward.1} parent=1 // pred_fallthru
      _
    // Predicated region
    $region30: #{intrinsic_critic_forward.1} parent=1 // pred_check
      _
    $region31: #{intrinsic_critic_forward.1} parent=1 // pred_check_branch
      %900 = sbr.rel (0) target = $region33
    $region32: #{intrinsic_critic_forward.1} parent=1 // pred_region
      _
    $region33: #{intrinsic_critic_forward.1} parent=1 // pred_fallthru
      _
    %901 = vsyncpa [#allocation3], 1

</llo_original>
